<compile_context>
chip_gen: v7x
topology: tpu7x:2x2x1
jax: 0.10.0
libtpu: 0.0.40
codegen_flags: <defaults>
</compile_context>

<pallas_src>
import functools

import jax
import jax.numpy as jnp
from jax.experimental import pallas as pl
from jax.experimental.pallas import tpu as pltpu


# ----------------------------------------------------------------------------
# Per-generation scoped-VMEM budget: ~70% of physical VMEM
# (v5e/v6e: 128 MiB -> ~90 MiB, v7x: 64 MiB -> ~45 MiB), safe fallback 48 MiB.
# ----------------------------------------------------------------------------
_VMEM_LIMIT_CACHE = None


def _vmem_limit_bytes():
    global _VMEM_LIMIT_CACHE
    if _VMEM_LIMIT_CACHE is None:
        limit = 48 * 1024 * 1024
        try:
            info = pltpu.get_tpu_info()
            phys = int(getattr(info, "vmem_capacity_bytes", 0))
            if phys > 0:
                limit = max(32 * 1024 * 1024,
                            min(phys * 7 // 10, 96 * 1024 * 1024))
        except Exception:
            pass
        _VMEM_LIMIT_CACHE = limit
    return _VMEM_LIMIT_CACHE


# ----------------------------------------------------------------------------
# Fused (LayerNorm?) -> matmul(bf16, f32 acc) -> bias -> (GELU?) -> (+residual?)
# ----------------------------------------------------------------------------
def _fused_linear_kernel(*refs, has_ln, activation, has_residual, eps):
    it = iter(refs)
    x_ref = next(it)
    if has_ln:
        g_ref = next(it)
        beta_ref = next(it)
    w_ref = next(it)
    b_ref = next(it)
    if has_residual:
        r_ref = next(it)
    o_ref = next(it)

    x = x_ref[...]
    if has_ln:
        xf = x.astype(jnp.float32)             # LN math in f32 (no bf16 VPU on v5e)
        mu = jnp.mean(xf, axis=-1, keepdims=True)
        var = jnp.mean((xf - mu) * (xf - mu), axis=-1, keepdims=True)
        xf = (xf - mu) * jax.lax.rsqrt(var + eps)
        xf = xf * g_ref[...] + beta_ref[...]
        xm = xf.astype(jnp.bfloat16)
    else:
        xm = x.astype(jnp.bfloat16)            # no-op if already bf16

    acc = jnp.dot(xm, w_ref[...], preferred_element_type=jnp.float32)
    acc = acc + b_ref[...]
    if activation == "gelu":
        acc = jax.nn.gelu(acc, approximate=True)   # tanh GELU; f32 epilogue
    if has_residual:
        acc = acc + r_ref[...].astype(jnp.float32)
    o_ref[...] = acc.astype(o_ref.dtype)


def fused_linear_pallas(x2d, w, b, *, ln=None, activation=None, residual=None,
                        out_dtype=jnp.float32, tm=512, tn=512, eps=1e-5):
    """x2d: (M, K) f32/bf16, w: (K, N) bf16, b: (N,) f32 -> (M, N) out_dtype.

    Optionally fuses a pre-LayerNorm (ln=(gamma, beta)), a GELU, and a residual
    add (residual: (M, N) f32).  Tiles M and N with parallel grid axes; the
    ragged last block is handled by Pallas (no wrapper-side padding copies).
    """
    M, K = x2d.shape
    Kw, N = w.shape
    assert K == Kw

    tm_eff = M if M <= tm else tm           # tm multiple of 8 when tiling
    tn_eff = N if N <= tn else tn           # tn multiple of 128 when tiling
    grid_m = pl.cdiv(M, tm_eff)
    grid_n = pl.cdiv(N, tn_eff)

    inputs = [x2d]
    in_specs = [pl.BlockSpec((tm_eff, K), lambda i, j: (i, 0))]
    if ln is not None:
        g, beta = ln
        inputs += [g.reshape(1, K).astype(jnp.float32),
                   beta.reshape(1, K).astype(jnp.float32)]
        in_specs += [pl.BlockSpec((1, K), lambda i, j: (0, 0)),
                     pl.BlockSpec((1, K), lambda i, j: (0, 0))]
    # TODO(synk): single-buffer these grid-invariant operands
    # (pipeline_mode=pl.Buffered(1)) to halve weight VMEM once validated.
    inputs += [w, b.reshape(1, N).astype(jnp.float32)]
    in_specs += [pl.BlockSpec((K, tn_eff), lambda i, j: (0, j)),
                 pl.BlockSpec((1, tn_eff), lambda i, j: (0, j))]
    if residual is not None:
        inputs.append(residual)
        in_specs.append(pl.BlockSpec((tm_eff, tn_eff), lambda i, j: (i, j)))

    kernel = functools.partial(
        _fused_linear_kernel, has_ln=ln is not None, activation=activation,
        has_residual=residual is not None, eps=eps)

    # TODO(synk): at real CLIP widths (K=1024/4096) add a K-reduction grid axis
    # with an f32 VMEM accumulator for the non-LN layers (FC2 / proj).
    return pl.pallas_call(
        kernel,
        out_shape=jax.ShapeDtypeStruct((M, N), out_dtype),
        grid=(grid_m, grid_n),
        in_specs=in_specs,
        out_specs=pl.BlockSpec((tm_eff, tn_eff), lambda i, j: (i, j)),
        compiler_params=pltpu.CompilerParams(
            dimension_semantics=("parallel", "parallel"),
            vmem_limit_bytes=_vmem_limit_bytes()),
    )(*inputs)


# ----------------------------------------------------------------------------
# Standalone LayerNorm (only for return_backbone_features), tiled over rows
# ----------------------------------------------------------------------------
def _layernorm_kernel(x_ref, g_ref, b_ref, o_ref, *, eps):
    x = x_ref[...].astype(jnp.float32)
    mu = jnp.mean(x, axis=-1, keepdims=True)
    var = jnp.mean((x - mu) * (x - mu), axis=-1, keepdims=True)
    y = (x - mu) * jax.lax.rsqrt(var + eps)
    o_ref[...] = (y * g_ref[...] + b_ref[...]).astype(o_ref.dtype)


def layernorm_pallas(x2d, gamma, beta, eps=1e-5, tm=512):
    M, D = x2d.shape
    tm_eff = M if M <= tm else tm
    grid_m = pl.cdiv(M, tm_eff)
    return pl.pallas_call(
        functools.partial(_layernorm_kernel, eps=eps),
        out_shape=jax.ShapeDtypeStruct((M, D), jnp.float32),
        grid=(grid_m,),
        in_specs=[pl.BlockSpec((tm_eff, D), lambda i: (i, 0)),
                  pl.BlockSpec((1, D), lambda i: (0, 0)),
                  pl.BlockSpec((1, D), lambda i: (0, 0))],
        out_specs=pl.BlockSpec((tm_eff, D), lambda i: (i, 0)),
        compiler_params=pltpu.CompilerParams(
            dimension_semantics=("parallel",),
            vmem_limit_bytes=_vmem_limit_bytes()),
    )(x2d, gamma.reshape(1, D).astype(jnp.float32),
      beta.reshape(1, D).astype(jnp.float32))


# ----------------------------------------------------------------------------
# Attention: one batch item per grid step; bf16 in/out; single lane-dense store
# ----------------------------------------------------------------------------
def _attention_kernel(qkv_ref, o_ref, *, num_heads, head_dim, model_dim, scale):
    qkv = qkv_ref[...]                         # (S, 3D) bf16
    D = model_dim
    outs = []
    # TODO(synk): at real head counts (H=16, dh=64) move heads (or head pairs)
    # to a grid axis / batched contraction instead of this static unroll, to
    # fill the 256-deep MXU on v6e/v7x and avoid sub-128-lane slices.
    for h in range(num_heads):
        q = qkv[:, h * head_dim:(h + 1) * head_dim]
        k = qkv[:, D + h * head_dim:D + (h + 1) * head_dim]
        v = qkv[:, 2 * D + h * head_dim:2 * D + (h + 1) * head_dim]
        # contract last dims directly (no .T / XLU transpose), bf16 MXU operands
        s = jax.lax.dot_general(
            q, k, (((1,), (1,)), ((), ())),
            preferred_element_type=jnp.float32) * scale
        s = s - jnp.max(s, axis=-1, keepdims=True)
        p = jnp.exp(s)
        p = p * pl.reciprocal(jnp.sum(p, axis=-1, keepdims=True), approx=True)
        o = jax.lax.dot_general(
            p.astype(jnp.bfloat16), v, (((1,), (0,)), ((), ())),
            preferred_element_type=jnp.float32)
        outs.append(o)
    # assemble the full (S, D) tile in VMEM, then one lane-dense store
    o_full = outs[0] if num_heads == 1 else jnp.concatenate(outs, axis=-1)
    o_ref[...] = o_full.astype(o_ref.dtype)


def attention_pallas(qkv, *, num_heads):
    """qkv: (B, S, 3*D) bf16 (fused QKV projection) -> attention out (B, S, D) bf16."""
    B, S, threeD = qkv.shape
    D = threeD // 3
    dh = D // num_heads
    scale = 1.0 / float(dh) ** 0.5
    kern = functools.partial(_attention_kernel, num_heads=num_heads,
                             head_dim=dh, model_dim=D, scale=scale)
    return pl.pallas_call(
        kern,
        out_shape=jax.ShapeDtypeStruct((B, S, D), jnp.bfloat16),
        grid=(B,),
        in_specs=[pl.BlockSpec((None, S, threeD), lambda b: (b, 0, 0))],
        out_specs=pl.BlockSpec((None, S, D), lambda b: (b, 0, 0)),
        compiler_params=pltpu.CompilerParams(
            dimension_semantics=("parallel",),
            vmem_limit_bytes=_vmem_limit_bytes()),
    )(qkv)


# ----------------------------------------------------------------------------
# Synthetic CLIP-like vision backbone parameters
# ----------------------------------------------------------------------------
def init_params(key, *, in_chans, patch, embed_dim, num_heads, mlp_ratio,
                num_patches, num_classes):
    ks = jax.random.split(key, 10)
    D = embed_dim
    hidden = int(D * mlp_ratio)
    s = 0.02
    p = {
        "w_patch": s * jax.random.normal(ks[0], (in_chans * patch * patch, D), jnp.float32),
        "b_patch": jnp.zeros((D,), jnp.float32),
        "cls_token": s * jax.random.normal(ks[1], (1, 1, D), jnp.float32),
        "pos_embed": s * jax.random.normal(ks[2], (1, num_patches + 1, D), jnp.float32),
        "ln1_g": jnp.ones((D,), jnp.float32), "ln1_b": jnp.zeros((D,), jnp.float32),
        "w_qkv": s * jax.random.normal(ks[3], (D, 3 * D), jnp.float32),
        "b_qkv": jnp.zeros((3 * D,), jnp.float32),
        "w_proj": s * jax.random.normal(ks[4], (D, D), jnp.float32),
        "b_proj": jnp.zeros((D,), jnp.float32),
        "ln2_g": jnp.ones((D,), jnp.float32), "ln2_b": jnp.zeros((D,), jnp.float32),
        "w_fc1": s * jax.random.normal(ks[5], (D, hidden), jnp.float32),
        "b_fc1": jnp.zeros((hidden,), jnp.float32),
        "w_fc2": s * jax.random.normal(ks[6], (hidden, D), jnp.float32),
        "b_fc2": jnp.zeros((D,), jnp.float32),
        "lnf_g": jnp.ones((D,), jnp.float32), "lnf_b": jnp.zeros((D,), jnp.float32),
        "w_head": s * jax.random.normal(ks[7], (D, num_classes), jnp.float32),
        "b_head": jnp.zeros((num_classes,), jnp.float32),
    }
    return p


class CLIPWrapperPallas:
    """JAX/Pallas re-implementation of CLIPWrapper forward semantics
    (non-timm branch: clip_model returns (cls_tok, patch_tok))."""

    def __init__(self, params, *, patch, num_heads, features):
        assert features in ("cls", "pos", "all")
        self.patch = patch
        self.num_heads = num_heads
        self.features = features
        self.num_classes = params["w_head"].shape[1]

        p = dict(params)
        # matmul weights as bf16 (halves weight HBM traffic; MXU-native).
        # Biases / LN params stay f32 for the VPU/EUP epilogue.
        for name in ("w_patch", "w_qkv", "w_proj", "w_fc1", "w_fc2"):
            p[name] = p[name].astype(jnp.bfloat16)
        # lane-dense classification head: pad N=5 up to 128 (unmasked stores),
        # slice the logits back in the wrapper.
        D = params["w_head"].shape[0]
        n_pad = max(128, ((self.num_classes + 127) // 128) * 128)
        w_head = jnp.zeros((D, n_pad), jnp.float32)
        w_head = w_head.at[:, :self.num_classes].set(params["w_head"])
        b_head = jnp.zeros((n_pad,), jnp.float32)
        b_head = b_head.at[:self.num_classes].set(params["b_head"])
        p["w_head"] = w_head.astype(jnp.bfloat16)
        p["b_head"] = b_head
        self.p = p

    # -- synthetic clip_model(x): returns PRE-final-LN token slab (B, S, D) ---
    def _backbone_tokens(self, x_nchw):
        p = self.p
        P = self.patch
        B, C, H, W = x_nchw.shape
        Hn, Wn = H // P, W // P
        Np = Hn * Wn
        D = p["w_patch"].shape[1]

        # TODO(synk): at real resolutions fold this im2col gather into the
        # patch-embed kernel's index_map instead of an XLA transpose; for now
        # emit the slab in bf16 so the shuffle costs half the HBM traffic.
        patches = (
            x_nchw.reshape(B, C, Hn, P, Wn, P)
            .transpose(0, 2, 4, 1, 3, 5)
            .reshape(B * Np, C * P * P)
            .astype(jnp.bfloat16)
        )
        tok = fused_linear_pallas(patches, p["w_patch"], p["b_patch"]).reshape(B, Np, D)

        cls = jnp.broadcast_to(p["cls_token"], (B, 1, D)).astype(jnp.float32)
        tok = jnp.concatenate([cls, tok], axis=1) + p["pos_embed"]  # (B, S, D) f32
        S = Np + 1
        tok2d = tok.reshape(B * S, D)                               # residual stream

        # --- transformer block (pre-LN); LN + residual fused into matmuls ---
        qkv = fused_linear_pallas(tok2d, p["w_qkv"], p["b_qkv"],
                                  ln=(p["ln1_g"], p["ln1_b"]),
                                  out_dtype=jnp.bfloat16)           # (B*S, 3D) bf16
        attn = attention_pallas(qkv.reshape(B, S, 3 * D),
                                num_heads=self.num_heads)           # (B, S, D) bf16
        tok2d = fused_linear_pallas(attn.reshape(B * S, D),
                                    p["w_proj"], p["b_proj"],
                                    residual=tok2d)                 # f32 (+residual)
        h = fused_linear_pallas(tok2d, p["w_fc1"], p["b_fc1"],
                                ln=(p["ln2_g"], p["ln2_b"]),
                                activation="gelu",
                                out_dtype=jnp.bfloat16)             # bf16 hidden
        tok2d = fused_linear_pallas(h, p["w_fc2"], p["b_fc2"],
                                    residual=tok2d)                 # f32 (+residual)
        # TODO(synk): real open_clip applies an extra visual projection to the
        # cls token for features in {'cls','pos'}; this synthetic backbone
        # keeps width D.
        return tok2d.reshape(B, S, D)                               # PRE final-LN

    def _head(self, t):
        """Classification head with the backbone's final LayerNorm fused in
        (LN is per-token, so head(LN(tok)) == head(post-LN tok))."""
        p = self.p
        lead = t.shape[:-1]
        out = fused_linear_pallas(t.reshape(-1, t.shape[-1]),
                                  p["w_head"], p["b_head"],
                                  ln=(p["lnf_g"], p["lnf_b"]))
        out = out[:, :self.num_classes]          # slice the lane-padded logits
        return out.reshape(*lead, self.num_classes)

    def __call__(self, x, return_backbone_features=False):
        p = self.p
        tok_pre = self._backbone_tokens(x)       # (B, S, D) pre final LN, f32
        B, S, D = tok_pre.shape

        if self.features == "cls":
            sel = tok_pre[:, 0]                  # (B, D)
        elif "all" in self.features:
            sel = tok_pre                        # (B, S, D)
        else:  # 'pos' -> head on patch tokens (matches PyTorch else-branch)
            sel = tok_pre[:, 1:]                 # (B, S-1, D)
        out = self._head(sel)

        if return_backbone_features:
            # backbone features are the post-final-LN tokens; only run the
            # standalone LN kernel on this path.
            if self.features == "cls":
                feat = layernorm_pallas(tok_pre[:, 0], p["lnf_g"], p["lnf_b"])
                return out, feat
            feat = layernorm_pallas(tok_pre[:, 1:].reshape(-1, D),
                                    p["lnf_g"], p["lnf_b"]).reshape(B, S - 1, D)
            return out, feat
        return out


# ----------------------------------------------------------------------------
if __name__ == "__main__":
    B, C, H, W = 2, 3, 16, 16
    patch = 4
    embed_dim = 32
    num_heads = 2
    mlp_ratio = 4.0
    num_classes = 5
    num_patches = (H // patch) * (W // patch)  # 16

    key = jax.random.PRNGKey(0)
    pkey, xkey = jax.random.split(key)
    params = init_params(
        pkey,
        in_chans=C,
        patch=patch,
        embed_dim=embed_dim,
        num_heads=num_heads,
        mlp_ratio=mlp_ratio,
        num_patches=num_patches,
        num_classes=num_classes,
    )
    x = jax.random.normal(xkey, (B, C, H, W), jnp.float32)  # NCHW, like PyTorch

    model_all = CLIPWrapperPallas(params, patch=patch, num_heads=num_heads, features="all")
    out_all, patch_feat = model_all(x, return_backbone_features=True)
    out_all = jax.block_until_ready(out_all)

    model_cls = CLIPWrapperPallas(params, patch=patch, num_heads=num_heads, features="cls")
    out_cls = jax.block_until_ready(model_cls(x))

    assert out_all.shape == (B, num_patches + 1, num_classes), out_all.shape
    assert patch_feat.shape == (B, num_patches, embed_dim), patch_feat.shape
    assert out_cls.shape == (B, num_classes), out_cls.shape
    assert bool(jnp.all(jnp.isfinite(out_all))) and bool(jnp.all(jnp.isfinite(out_cls)))

    print("KERNEL_OK")
</pallas_src>

<mosaic_0001>
module attributes {stable_mosaic.version = 11 : i64} {
  func.func @_fused_linear_kernel(%arg0: i32, %arg1: i32, %arg2: memref<32x48xbf16, #tpu.memory_space<vmem>>, %arg3: memref<48x32xbf16, #tpu.memory_space<vmem>>, %arg4: memref<1x32xf32, #tpu.memory_space<vmem>>, %arg5: memref<32x32xf32, #tpu.memory_space<vmem>>) attributes {dimension_semantics = [#tpu.dimension_semantics<parallel>, #tpu.dimension_semantics<parallel>], iteration_bounds = array<i64: 1, 1>, scalar_prefetch = 0 : i64, scratch_operands = 0 : i64, tpu.core_type = #tpu.core_type<tc>, window_params = [{transform_indices = @transform_0, window_bounds = array<i64: 32, 48>}, {transform_indices = @transform_1, window_bounds = array<i64: 48, 32>}, {transform_indices = @transform_2, window_bounds = array<i64: 1, 32>}, {transform_indices = @transform_3, window_bounds = array<i64: 32, 32>}]} {
    %c0 = arith.constant 0 : index
    %c0_0 = arith.constant 0 : index
    %0 = vector.load %arg2[%c0, %c0_0] : memref<32x48xbf16, #tpu.memory_space<vmem>>, vector<32x48xbf16>
    %c0_1 = arith.constant 0 : index
    %c0_2 = arith.constant 0 : index
    %1 = vector.load %arg3[%c0_1, %c0_2] : memref<48x32xbf16, #tpu.memory_space<vmem>>, vector<48x32xbf16>
    %cst = arith.constant dense<0.000000e+00> : vector<32x32xf32>
    %2 = tpu.matmul %0, %1, %cst {dimension_numbers = #tpu.dot_dimension_numbers<[1], [0], [0], [1], [0, 0, 1, 1], [], []>} : vector<32x48xbf16>, vector<48x32xbf16>, vector<32x32xf32> -> vector<32x32xf32>
    %c0_3 = arith.constant 0 : index
    %c0_4 = arith.constant 0 : index
    %3 = vector.load %arg4[%c0_3, %c0_4] : memref<1x32xf32, #tpu.memory_space<vmem>>, vector<1x32xf32>
    %4 = vector.broadcast %3 : vector<1x32xf32> to vector<32x32xf32>
    %5 = arith.addf %2, %4 : vector<32x32xf32>
    %c0_5 = arith.constant 0 : index
    %c0_6 = arith.constant 0 : index
    %6 = vector.load %arg5[%c0_5, %c0_6] : memref<32x32xf32, #tpu.memory_space<vmem>>, vector<32x32xf32>
    tpu.vector_store %arg5[%c0_5, %c0_6], %5 {strides = array<i32>} : memref<32x32xf32, #tpu.memory_space<vmem>>, vector<32x32xf32>,
    return
  }
  func.func @transform_0(%arg0: i32, %arg1: i32) -> (i32, i32) {
    %c0_i32 = arith.constant 0 : i32
    %c0_i32_0 = arith.constant 0 : i32
    return %arg0, %c0_i32 : i32, i32
  }
  func.func @transform_1(%arg0: i32, %arg1: i32) -> (i32, i32) {
    %c0_i32 = arith.constant 0 : i32
    %c0_i32_0 = arith.constant 0 : i32
    return %c0_i32, %arg1 : i32, i32
  }
  func.func @transform_2(%arg0: i32, %arg1: i32) -> (i32, i32) {
    %c0_i32 = arith.constant 0 : i32
    %c0_i32_0 = arith.constant 0 : i32
    return %c0_i32, %arg1 : i32, i32
  }
  func.func @transform_3(%arg0: i32, %arg1: i32) -> (i32, i32) {
    %c0_i32 = arith.constant 0 : i32
    return %arg0, %arg1 : i32, i32
  }
}

</mosaic_0001>

<llo_original>
// kernel: tpu_custom_call.1
$region0: #{tpu_custom_call.1}
  #allocation0 [shape = 'u32[]', space=smem, size = 0x4, offset = 0x4, fixed_abs, tag = 'smem constant byte address 0x4 - core index']
  #allocation1 [shape = 'u32[144,128]{1,0:T(1,128)}', space=vmem, size = 0x12000, scoped, tag = 'internal scratch']
  %s0 = inlined_call_operand.vmem [shape: bf16[32,48], index: 0, kind: input, shape index: {}]
  %s1 = inlined_call_operand.vmem [shape: bf16[48,32], index: 1, kind: input, shape index: {}]
  %s2 = inlined_call_operand.vmem [shape: f32[1,32], index: 2, kind: input, shape index: {}]
  %s3 = inlined_call_operand.hbm [shape: f32[32,32], index: 3, kind: output, shape index: {}]
  %s4 = sld [smem:[#allocation0]]
  $region22: #{tpu_custom_call.1} parent=0
    _
  %s6 = ssub.s32 1, %s4
  %s7 = scalar_select 0, %s6, %s4
  $region1: #{tpu_custom_call.1} parent=0
    #allocation2 [shape = 'u8[16384]{0}', space=vmem, size = 0x4000, scoped, tag = 'output window, operand 0, single buffered']
    #allocation3 [shape = 's32[1]{0}', space=sflag, size = 0x4, scoped, tag = 'scoped memory for tpu_custom_call.1']
    %8 = vsyncpa [#allocation3], 0
    // Predicated region
    $region2: #{tpu_custom_call.1} parent=1 // pred_check
      _
    $region3: #{tpu_custom_call.1} parent=1 // pred_check_branch
      %10 = sbr.rel (0) target = $region5
    $region4: #{tpu_custom_call.1} parent=1 // pred_region
      _
    $region5: #{tpu_custom_call.1} parent=1 // pred_fallthru
      _
    // Predicated region
    $region6: #{tpu_custom_call.1} parent=1 // pred_check
      _
    $region7: #{tpu_custom_call.1} parent=1 // pred_check_branch
      %12 = sbr.rel (0) target = $region9
    $region8: #{tpu_custom_call.1} parent=1 // pred_region
      _
    $region9: #{tpu_custom_call.1} parent=1 // pred_fallthru
      _
    // Predicated region
    $region10: #{tpu_custom_call.1} parent=1 // pred_check
      _
    $region11: #{tpu_custom_call.1} parent=1 // pred_check_branch
      %14 = sbr.rel (0) target = $region13
    $region12: #{tpu_custom_call.1} parent=1 // pred_region
      _
    $region13: #{tpu_custom_call.1} parent=1 // pred_fallthru
      _
    %v16 = vld [vmem:[%s0] sm:$0xf]
    %v17 = vld [vmem:[%s0 + $0x4] sm:$0xf]
    %v18 = vld [vmem:[%s0 + $0x8] sm:$0xf]
    %v19 = vld [vmem:[%s0 + $0xc] sm:$0xf]
    %v20 = vld [vmem:[%s1] sm:$0xf]
    %v21 = vld [vmem:[%s1 + $0x4] sm:$0xf]
    %v22 = vld [vmem:[%s1 + $0x8] sm:$0xf]
    %v23 = vld [vmem:[%s1 + $0xc] sm:$0xf]
    %v24 = vld [vmem:[%s1 + $0x10] sm:$0xf]
    %v25 = vld [vmem:[%s1 + $0x14] sm:$0xf]
    %v26 = vld [vmem:[%s2] sm:$0x1]
    %v28 = vlaneseq
    %v29 = vshrl.u32 %v28, 7
    %v30 = vsub.s32 0, %v29
    %v31 = vrot.slane %v26, %v30
    %v37 = vunpack.c.l.b16 %v16
    %v38 = vunpack.c.l.b16 %v17
    %v39 = vunpack.c.l.b16 %v18
    %v40 = vunpack.c.l.b16 %v19
    %v41 = vpack.c.b16 %v38, %v37
    %v42 = vpack.c.b16 %v40, %v39
    %v49 = vunpack.c.l.b16 %v20
    %v50 = vunpack.c.l.b16 %v21
    %v51 = vunpack.c.l.b16 %v22
    %v52 = vunpack.c.l.b16 %v23
    %v53 = vunpack.c.l.b16 %v24
    %v54 = vunpack.c.l.b16 %v25
    %v55 = vpack.c.b16 %v50, %v49
    %v56 = vpack.c.b16 %v52, %v51
    %v57 = vpack.c.b16 %v54, %v53
    %vm61 = vcmask 392192
    %v63 = vsel %vm61, %v41, 0
    %v66 = vsel %vm61, %v42, 0
    %68 = vmatprep.subr.bf16.mxu0 0
    %69 = vmatpush1.bf16.msra.mxu0 %v55
    %70 = vmatprep.subr.bf16.mxu0 0
    %71 = vmatpush1.bf16.msra.mxu0 %v56
    %72 = vmatprep.subr.bf16.mxu0 0
    %73 = vmatpush1.bf16.msra.mxu0 %v57
    %74 = vmatprep.subr.bf16.mxu0 0
    %75 = vmatpush1.bf16.msra.mxu0 0
    %76 = vmatprep.subr.bf16.mxu0 0
    %77 = vmatpush1.bf16.msra.mxu0 0
    %78 = vmatprep.subr.bf16.mxu0 0
    %79 = vmatpush1.bf16.msra.mxu0 0
    %80 = vmatprep.subr.bf16.mxu0 0
    %81 = vmatpush1.bf16.msra.mxu0 0
    %82 = vmatprep.subr.bf16.mxu0 0
    %83 = vmatpush1.bf16.msra.mxu0 0
    %84 = vmatprep.subr.bf16.mxu0 0
    %85 = vmatpush1.bf16.msra.mxu0 0
    %86 = vmatprep.subr.bf16.mxu0 0
    %87 = vmatpush1.bf16.msra.mxu0 0
    %88 = vmatprep.subr.bf16.mxu0 0
    %89 = vmatpush1.bf16.msra.mxu0 0
    %90 = vmatprep.subr.bf16.mxu0 0
    %91 = vmatpush1.bf16.msra.mxu0 0
    %92 = vmatprep.subr.bf16.mxu0 0
    %93 = vmatpush1.bf16.msra.mxu0 0
    %94 = vmatprep.subr.bf16.mxu0 0
    %95 = vmatpush1.bf16.msra.mxu0 0
    %96 = vmatprep.subr.bf16.mxu0 0
    %97 = vmatpush1.bf16.msra.mxu0 0
    %98 = vmatprep.subr.bf16.mxu0 0
    %99 = vmatpush1.bf16.msra.mxu0 0
    %100 = vmatprep.mubr.bf16.mxu0 0
    %101 = vmatmul.mubr.bf16.gmra.mrb[0].mxu0 %v63
    %v102 = vpop.f32.mrb[0].mxu0
    %v103 = vadd.f32 %v31, %v102
    %v104 = vpop.f32.mrb[0].mxu0
    %v105 = vpop.f32.mrb[0].mxu0
    %v106 = vadd.f32 %v31, %v105
    %v107 = vpop.f32.mrb[0].mxu0
    %108 = vmatprep.mubr.bf16.mxu0 0
    %109 = vmatmul.mubr.bf16.gmra.mrb[0].mxu0 %v66
    %v110 = vpop.f32.mrb[0].mxu0
    %v111 = vadd.f32 %v31, %v110
    %v112 = vpop.f32.mrb[0].mxu0
    %v113 = vpop.f32.mrb[0].mxu0
    %v114 = vadd.f32 %v31, %v113
    %v115 = vpop.f32.mrb[0].mxu0
    %116 = vdwg.mxu0
    %vm117 = vcmask 261120
    %118 = vst.msk [vmem:[#allocation2] sm:$0xff] %vm117, %v103
    %119 = vst.msk [vmem:[#allocation2 + $0x8] sm:$0xff] %vm117, %v106
    %120 = vst.msk [vmem:[#allocation2 + $0x10] sm:$0xff] %vm117, %v111
    %121 = vst.msk [vmem:[#allocation2 + $0x18] sm:$0xff] %vm117, %v114
    // Predicated region
    $region14: #{tpu_custom_call.1} parent=1 // pred_check
      _
    $region15: #{tpu_custom_call.1} parent=1 // pred_check_branch
      %123 = sbr.rel (0) target = $region17
    $region16: #{tpu_custom_call.1} parent=1 // pred_region
      %s125 = ssub.s32 512, 512
      %126 = vsyncadd [#allocation3], %s125
      %s127 = sshll.u32 [#allocation2], 4
      %s128 = int_to_ptr.vmem [resolvable:$true] %s127
      %133 = dma.vmem_to_hbm [thread:$0]  %s128, 512, %s3, [#allocation3], 128, 128, 8
    $region17: #{tpu_custom_call.1} parent=1 // pred_fallthru
      _
    // Predicated region
    $region18: #{tpu_custom_call.1} parent=1 // pred_check
      _
    $region19: #{tpu_custom_call.1} parent=1 // pred_check_branch
      %135 = sbr.rel (0) target = $region21
    $region20: #{tpu_custom_call.1} parent=1 // pred_region
      %136 = dma.done [#allocation3], 512
    $region21: #{tpu_custom_call.1} parent=1 // pred_fallthru
      _
    %137 = vsyncpa [#allocation3], 1

</llo_original>
